<compile_context>
chip_gen: v7x
topology: tpu7x:2x2x1
jax: 0.10.0
libtpu: 0.0.40
codegen_flags: <defaults>
</compile_context>

<pallas_src>
import math
import functools

import jax
import jax.numpy as jnp
from jax import lax
from jax.experimental import pallas as pl
from jax.experimental.pallas import tpu as pltpu

CONFIG = dict(
    max_position_embeddings=2048,
    embedding_size=768,
)


def make_sinusoidal_pe(max_position_embeddings: int, embedding_size: int) -> jnp.ndarray:
    """Same construction as SinusoidalPositionEmbedding.__init__ (host-side glue)."""
    position = jnp.arange(0, max_position_embeddings, dtype=jnp.float32)[:, None]   # [P, 1]
    div_term = jnp.exp(
        jnp.arange(0, embedding_size, 2, dtype=jnp.float32)
        * -(math.log(10000.0) / embedding_size)
    )                                                                                # [E/2]
    angles = position * div_term                                                     # [P, E/2]
    # interleave: pe[:, 0::2] = sin, pe[:, 1::2] = cos
    pe = jnp.stack([jnp.sin(angles), jnp.cos(angles)], axis=-1).reshape(
        max_position_embeddings, embedding_size
    )
    return pe.astype(jnp.float32)


def _round_up(x: int, m: int) -> int:
    return ((x + m - 1) // m) * m


def _choose_tiles(B: int, S: int, E: int, in_bytes: int, out_bytes: int,
                  budget_bytes: int = 12 << 20, max_t: int = 512):
    """Pick (T, Bb) so the double-buffered per-step VMEM footprint
    2*T*E*(in_bytes + Bb*out_bytes) stays under `budget_bytes` on all chip
    generations (v5e 16 MiB / v6e 32 MiB / v7x 32 MiB default scoped VMEM)."""
    # Seq tile: sublane-aligned (multiple of 8), capped so a single-row batch
    # block always fits the budget.
    T = min(_round_up(S, 8), max_t)
    if 2 * T * E * (in_bytes + out_bytes) > budget_bytes:
        T = max(8, (budget_bytes // (2 * E * (in_bytes + out_bytes))) // 8 * 8)

    # Batch tile: largest Bb under the remaining budget.
    avail = budget_bytes - 2 * T * E * in_bytes          # input double-buffer
    Bb = int(max(1, min(B, avail // (2 * T * E * out_bytes))))

    # Guarantee >= 2 independent grid steps when possible so v7x's second
    # TensorCore isn't idle (harmless no-op on v5e/v6e).
    if pl.cdiv(S, T) * pl.cdiv(B, Bb) == 1:
        if B > 1:
            Bb = (B + 1) // 2
        elif S > 8:
            T = max(8, _round_up(pl.cdiv(S, 2), 8))

    return T, Bb


def _pe_broadcast_kernel(pe_ref, out_ref):
    # pe_ref : VMEM (T, E)     — one seq-tile of the PE table.  The batch grid
    #                            axis is innermost and this block's index does
    #                            not depend on it, so Pallas fetches each PE
    #                            tile from HBM exactly once per seq tile.
    # out_ref: VMEM (Bb, T, E) — the tile replicated across a batch tile.
    pe = pe_ref[...].astype(out_ref.dtype)

    def body(b, carry):
        out_ref[b] = pe            # pure vld -> vst stream, no (Bb,T,E) temp
        return carry

    lax.fori_loop(0, out_ref.shape[0], body, 0, unroll=True)


@functools.partial(jax.jit, static_argnames=("out_dtype",))
def sinusoidal_position_embedding_forward(input_ids, pe_table, *, out_dtype=None):
    """Pallas-backed forward: pe[:S, :].unsqueeze(0).expand(B, S, E)."""
    B, S = input_ids.shape
    _, E = pe_table.shape
    out_dtype = pe_table.dtype if out_dtype is None else jnp.dtype(out_dtype)

    in_bytes = jnp.dtype(pe_table.dtype).itemsize
    out_bytes = jnp.dtype(out_dtype).itemsize
    T, Bb = _choose_tiles(B, S, E, in_bytes, out_bytes)

    # Batch axis last => fastest varying => PE block reused across it.
    grid = (pl.cdiv(S, T), pl.cdiv(B, Bb))

    out = pl.pallas_call(
        _pe_broadcast_kernel,
        out_shape=jax.ShapeDtypeStruct((B, S, E), out_dtype),
        grid_spec=pl.GridSpec(
            grid=grid,
            # Full pe_table passed directly (no wrapper slice / extra HBM copy);
            # only blocks 0 .. ceil(S/T)-1 are ever DMA'd.
            in_specs=[pl.BlockSpec((T, E), lambda i, b: (i, 0))],
            out_specs=pl.BlockSpec((Bb, T, E), lambda i, b: (b, i, 0)),
        ),
        compiler_params=pltpu.CompilerParams(
            # Both grid axes are fully independent -> shardable across v7x's
            # two TensorCores; no-op on v5e/v6e.
            dimension_semantics=("parallel", "parallel"),
        ),
    )(pe_table)

    return out


if __name__ == "__main__":
    P = CONFIG["max_position_embeddings"]
    E = CONFIG["embedding_size"]

    # Small forward-pass shapes consistent with the module: input_ids [B, S].
    B, S = 2, 8

    key = jax.random.PRNGKey(0)
    pe_table = make_sinusoidal_pe(P, E)
    # input_ids only contributes its shape (exactly as in the PyTorch forward).
    input_ids = jax.random.randint(key, (B, S), 0, 50257, dtype=jnp.int32)

    out = sinusoidal_position_embedding_forward(input_ids, pe_table)
    out = jax.block_until_ready(out)

    # Reference: pe[:S, :].unsqueeze(0).expand(B, -1, -1)
    ref = jnp.broadcast_to(pe_table[:S, :][None, :, :], (B, S, E))
    assert out.shape == (B, S, E)
    assert jnp.allclose(out, ref, atol=1e-6, rtol=1e-6), "mismatch vs reference"

    print("KERNEL_OK")
</pallas_src>

<mosaic_0001>
module attributes {stable_mosaic.version = 11 : i64} {
  func.func @_pe_broadcast_kernel(%arg0: i32, %arg1: i32, %arg2: memref<8x768xf32, #tpu.memory_space<vmem>>, %arg3: memref<1x8x768xf32, #tpu.memory_space<vmem>>) attributes {dimension_semantics = [#tpu.dimension_semantics<parallel>, #tpu.dimension_semantics<parallel>], iteration_bounds = array<i64: 1, 2>, scalar_prefetch = 0 : i64, scratch_operands = 0 : i64, tpu.core_type = #tpu.core_type<tc>, window_params = [{transform_indices = @transform_0, window_bounds = array<i64: 8, 768>}, {transform_indices = @transform_1, window_bounds = array<i64: 1, 8, 768>}]} {
    %c0 = arith.constant 0 : index
    %c0_0 = arith.constant 0 : index
    %0 = vector.load %arg2[%c0, %c0_0] : memref<8x768xf32, #tpu.memory_space<vmem>>, vector<8x768xf32>
    %c0_i32 = arith.constant 0 : i32
    %1 = arith.index_cast %c0_i32 : i32 to index
    %c0_1 = arith.constant 0 : index
    %c0_2 = arith.constant 0 : index
    %2 = vector.load %arg3[%1, %c0_1, %c0_2] : memref<1x8x768xf32, #tpu.memory_space<vmem>>, vector<1x8x768xf32>
    %3 = vector.shape_cast %2 : vector<1x8x768xf32> to vector<8x768xf32>
    %4 = vector.shape_cast %0 : vector<8x768xf32> to vector<1x8x768xf32>
    tpu.vector_store %arg3[%1, %c0_1, %c0_2], %4 {strides = array<i32>} : memref<1x8x768xf32, #tpu.memory_space<vmem>>, vector<1x8x768xf32>,
    %c1_i32 = arith.constant 1 : i32
    return
  }
  func.func @transform_0(%arg0: i32, %arg1: i32) -> (i32, i32) {
    %c0_i32 = arith.constant 0 : i32
    %c0_i32_0 = arith.constant 0 : i32
    return %arg0, %c0_i32 : i32, i32
  }
  func.func @transform_1(%arg0: i32, %arg1: i32) -> (i32, i32, i32) {
    %c0_i32 = arith.constant 0 : i32
    %c0_i32_0 = arith.constant 0 : i32
    return %arg1, %arg0, %c0_i32 : i32, i32, i32
  }
}

</mosaic_0001>

<llo_original>
// kernel: sinusoidal_position_embedding_forward.1
$region0: #{sinusoidal_position_embedding_forward.1}
  #allocation0 [shape = 'u32[]', space=smem, size = 0x4, offset = 0x4, fixed_abs, tag = 'smem constant byte address 0x4 - core index']
  #allocation1 [shape = 'u32[144,128]{1,0:T(1,128)}', space=vmem, size = 0x12000, scoped, tag = 'internal scratch']
  %s0 = inlined_call_operand.hbm [shape: f32[2048,768], index: 0, kind: input, shape index: {}]
  %s1 = inlined_call_operand.hbm [shape: f32[2,8,768], index: 1, kind: output, shape index: {}]
  %s2 = sld [smem:[#allocation0]]
  $region41: #{sinusoidal_position_embedding_forward.1} parent=0
    _
  %s4 = ssub.s32 1, %s2
  %s5 = scalar_select 0, %s4, %s2
  $region1: #{sinusoidal_position_embedding_forward.1} parent=0
    #allocation2 [shape = 'u8[24576]{0}', space=vmem, size = 0x6000, scoped, tag = 'input window, operand 0, single buffered']
    #allocation3 [shape = 's32[2]{0}', space=sflag, size = 0x8, scoped, tag = 'scoped memory for sinusoidal_position_embedding_forward.1']
    #allocation4 [shape = 's32[2]{0}', space=sflag, size = 0x8, scoped, tag = 'scoped memory for sinusoidal_position_embedding_forward.1']
    #allocation5 [shape = 'u8[49152]{0}', space=vmem, size = 0xc000, scoped, tag = 'output window, operand 0']
    %6 = vsyncpa [#allocation3], 0
    %7 = vsyncpa [#allocation4], 0
    %s8 = scalar_lea.sflag [#allocation4], 1
    %9 = vsyncpa %s8, 0
    loop: start=0, step=1, limit=4
    $region2: #{sinusoidal_position_embedding_forward.1} parent=1 // loop_pre_header
      _
    $region3: #{sinusoidal_position_embedding_forward.1} parent=1 // loop_header
      %s11 = sphi 0, %s15
      %p12 = scmp.ge.s32.totalorder %s11, 4
      %s18 = sphi 0, %s30
      %s19 = sphi 0, %s26
      %s20 = sphi 0, %s18
      %s21 = sphi 0, %s19
      %s22 = sphi 0, %s20
      %s23 = sphi 0, %s21
      %s33 = sphi 0, %s35
      %s36 = sphi 0, %s33
      %s37 = sphi 0, %s36
      %s53 = sphi 0, %s37
      %s61 = sphi 0, %s63
      %s64 = sphi 0, %s61
      %s65 = sphi 0, %s64
      %s81 = sphi 0, %s65
    $region4: #{sinusoidal_position_embedding_forward.1} parent=1 // loop_header_branch
      %14 = sbr.rel (%p12) target = $region8
    $region5: #{sinusoidal_position_embedding_forward.1} parent=1 // loop_body
      %s16 = ssub.s32 %s11, 1
      %s17 = ssub.s32 %s11, 2
      %s24 = sadd.s32 1, %s19
      %p25 = scmp.ge.s32.totalorder %s24, 2
      %s26 = scalar_select %p25, 0, %s24
      %s27 = sadd.s32 1, %s18
      %s28 = scalar_select %p25, %s27, %s18
      %p29 = scmp.ge.s32.totalorder %s28, 1
      %s30 = scalar_select %p29, 0, %s28
      %s31 = ssub.s32 %s18, %s30
      %p32 = scmp.eq.s32.totalorder %s31, 0
      %s34 = sadd.s32 %s33, 1
      %s35 = scalar_select %p32, %s33, %s34
      %p38 = pneg %p32
      %p39 = scmp.eq.s32.totalorder %s11, 1
      %p40 = por %p38, %p39
      %p41 = scmp.ne.s32.totalorder %s33, %s36
      %p42 = scmp.eq.s32.totalorder %s11, 0
      %p43 = por %p41, %p42
      %p44 = scmp.ne.s32.totalorder %s33, %s36
      %p45 = scmp.eq.s32.totalorder %s16, 1
      %p46 = por %p44, %p45
      %p47 = scmp.ne.s32.totalorder %s36, %s37
      %p48 = scmp.eq.s32.totalorder %s16, 0
      %p49 = por %p47, %p48
      %p50 = scmp.ne.s32.totalorder %s36, %s37
      %p51 = scmp.eq.s32.totalorder %s17, 1
      %p52 = por %p50, %p51
      %p54 = scmp.ne.s32.totalorder %s37, %s53
      %p55 = scmp.eq.s32.totalorder %s17, 0
      %p56 = por %p54, %p55
      %s57 = ssub.s32 %s19, %s26
      %s58 = ssub.s32 %s18, %s30
      %s59 = sor.u32 %s57, %s58
      %p60 = scmp.eq.s32.totalorder %s59, 0
      %s62 = sadd.s32 %s61, 1
      %s63 = scalar_select %p60, %s61, %s62
      %p66 = pneg %p60
      %p67 = scmp.eq.s32.totalorder %s11, 1
      %p68 = por %p66, %p67
      %p69 = scmp.ne.s32.totalorder %s61, %s64
      %p70 = scmp.eq.s32.totalorder %s11, 0
      %p71 = por %p69, %p70
      %p72 = scmp.ne.s32.totalorder %s61, %s64
      %p73 = scmp.eq.s32.totalorder %s16, 1
      %p74 = por %p72, %p73
      %p75 = scmp.ne.s32.totalorder %s64, %s65
      %p76 = scmp.eq.s32.totalorder %s16, 0
      %p77 = por %p75, %p76
      %p78 = scmp.ne.s32.totalorder %s64, %s65
      %p79 = scmp.eq.s32.totalorder %s17, 1
      %p80 = por %p78, %p79
      %p82 = scmp.ne.s32.totalorder %s65, %s81
      %p83 = scmp.eq.s32.totalorder %s17, 0
      %p84 = por %p82, %p83
      %p85 = scmp.le.s32.totalorder 1, %s11
      %p86 = scmp.lt.s32.totalorder %s11, 3
      %p87 = pnand %p85, %p86
      %p88 = pneg %p87
      // Predicated region
      $region9: #{sinusoidal_position_embedding_forward.1} parent=5 // pred_check
        _
      $region10: #{sinusoidal_position_embedding_forward.1} parent=5 // pred_check_branch
        %90 = sbr.rel (%p87) target = $region12
      $region11: #{sinusoidal_position_embedding_forward.1} parent=5 // pred_region
        %s91 = ssub.s32 %s11, 1
        // Predicated region
        $region13: #{sinusoidal_position_embedding_forward.1} parent=11 // pred_check
          %p92 = pneg %p49
        $region14: #{sinusoidal_position_embedding_forward.1} parent=11 // pred_check_branch
          %94 = sbr.rel (%p92) target = $region16
        $region15: #{sinusoidal_position_embedding_forward.1} parent=11 // pred_region
          %s96 = ssub.s32 768, 768
          %97 = vsyncadd [#allocation3], %s96
          %s98 = smul.addr %s20, 6
          %s99 = smul.addr %s98, 128
          %s100 = scalar_lea.hbm %s0, %s99
          %s102 = sshll.u32 [#allocation2], 4
          %s103 = int_to_ptr.vmem [resolvable:$true] %s102
          %105 = dma.hbm_to_vmem [thread:$0]  %s100, 768, %s103, [#allocation3]
        $region16: #{sinusoidal_position_embedding_forward.1} parent=11 // pred_fallthru
          _
      $region12: #{sinusoidal_position_embedding_forward.1} parent=5 // pred_fallthru
        _
      %p106 = scmp.lt.s32.totalorder %s11, 2
      // Predicated region
      $region17: #{sinusoidal_position_embedding_forward.1} parent=5 // pred_check
        %p107 = pneg %p106
      $region18: #{sinusoidal_position_embedding_forward.1} parent=5 // pred_check_branch
        %109 = sbr.rel (%p107) target = $region20
      $region19: #{sinusoidal_position_embedding_forward.1} parent=5 // pred_region
        _
      $region20: #{sinusoidal_position_embedding_forward.1} parent=5 // pred_fallthru
        _
      %p110 = scmp.le.s32.totalorder 1, %s11
      %p111 = scmp.lt.s32.totalorder %s11, 3
      %p112 = pnand %p110, %p111
      %p113 = pneg %p112
      // Predicated region
      $region21: #{sinusoidal_position_embedding_forward.1} parent=5 // pred_check
        _
      $region22: #{sinusoidal_position_embedding_forward.1} parent=5 // pred_check_branch
        %115 = sbr.rel (%p112) target = $region24
      $region23: #{sinusoidal_position_embedding_forward.1} parent=5 // pred_region
        %s116 = ssub.s32 %s11, 1
        // Predicated region
        $region25: #{sinusoidal_position_embedding_forward.1} parent=23 // pred_check
          %p117 = pneg %p49
        $region26: #{sinusoidal_position_embedding_forward.1} parent=23 // pred_check_branch
          %119 = sbr.rel (%p117) target = $region28
        $region27: #{sinusoidal_position_embedding_forward.1} parent=23 // pred_region
          %120 = dma.done [#allocation3], 768
        $region28: #{sinusoidal_position_embedding_forward.1} parent=23 // pred_fallthru
          _
        %p121 = pneg %p49
        %p122 = pneg %p46
        %p123 = pneg %p77
        %p124 = pneg %p74
        %s125 = sand.u32 %s64, 1
        %s126 = scalar_lea.sflag [#allocation4], %s125
        %s127 = sand.u32 %s64, 1
        %s128 = smul.addr %s127, 48
        %s129 = scalar_lea.vmem [#allocation5], %s128
        %v130 = vld [vmem:[#allocation2] sm:$0xff]
        %v131 = vld [vmem:[#allocation2 + $0x8] sm:$0xff]
        %v132 = vld [vmem:[#allocation2 + $0x10] sm:$0xff]
        %v133 = vld [vmem:[#allocation2 + $0x18] sm:$0xff]
        %v134 = vld [vmem:[#allocation2 + $0x20] sm:$0xff]
        %v135 = vld [vmem:[#allocation2 + $0x28] sm:$0xff]
        %136 = vst [vmem:[%s129] sm:$0xff] %v130
        %137 = vst [vmem:[%s129 + $0x8] sm:$0xff] %v131
        %138 = vst [vmem:[%s129 + $0x10] sm:$0xff] %v132
        %139 = vst [vmem:[%s129 + $0x18] sm:$0xff] %v133
        %140 = vst [vmem:[%s129 + $0x20] sm:$0xff] %v134
        %141 = vst [vmem:[%s129 + $0x28] sm:$0xff] %v135
        %s142 = sand.u32 %s64, 1
        %s143 = scalar_lea.sflag [#allocation4], %s142
        %s144 = sand.u32 %s64, 1
        %s145 = smul.addr %s144, 48
        %s146 = scalar_lea.vmem [#allocation5], %s145
        // Predicated region
        $region29: #{sinusoidal_position_embedding_forward.1} parent=23 // pred_check
          %p147 = pneg %p74
        $region30: #{sinusoidal_position_embedding_forward.1} parent=23 // pred_check_branch
          %149 = sbr.rel (%p147) target = $region32
        $region31: #{sinusoidal_position_embedding_forward.1} parent=23 // pred_region
          %s151 = ssub.s32 768, 768
          %152 = vsyncadd %s143, %s151
          %s153 = smul.addr %s20, 6
          %s154 = smul.addr %s21, 6
          %s155 = sadd.s32 %s153, %s154
          %s156 = smul.addr %s155, 128
          %s157 = scalar_lea.hbm %s1, %s156
          %s159 = sshll.u32 %s146, 4
          %s160 = int_to_ptr.vmem [resolvable:$true] %s159
          %162 = dma.vmem_to_hbm [thread:$0]  %s160, 768, %s157, %s143
        $region32: #{sinusoidal_position_embedding_forward.1} parent=23 // pred_fallthru
          _
      $region24: #{sinusoidal_position_embedding_forward.1} parent=5 // pred_fallthru
        _
      %p163 = scmp.le.s32.totalorder 2, %s11
      // Predicated region
      $region33: #{sinusoidal_position_embedding_forward.1} parent=5 // pred_check
        %p164 = pneg %p163
      $region34: #{sinusoidal_position_embedding_forward.1} parent=5 // pred_check_branch
        %166 = sbr.rel (%p164) target = $region36
      $region35: #{sinusoidal_position_embedding_forward.1} parent=5 // pred_region
        %s167 = ssub.s32 %s11, 2
        // Predicated region
        $region37: #{sinusoidal_position_embedding_forward.1} parent=35 // pred_check
          %p168 = pneg %p80
        $region38: #{sinusoidal_position_embedding_forward.1} parent=35 // pred_check_branch
          %170 = sbr.rel (%p168) target = $region40
        $region39: #{sinusoidal_position_embedding_forward.1} parent=35 // pred_region
          %s171 = sand.u32 %s65, 1
          %s172 = scalar_lea.sflag [#allocation4], %s171
          %s173 = sand.u32 %s65, 1
          %s174 = smul.addr %s173, 48
          %s175 = scalar_lea.vmem [#allocation5], %s174
          %176 = dma.done %s172, 768
        $region40: #{sinusoidal_position_embedding_forward.1} parent=35 // pred_fallthru
          _
      $region36: #{sinusoidal_position_embedding_forward.1} parent=5 // pred_fallthru
        _
    $region6: #{sinusoidal_position_embedding_forward.1} parent=1 // loop_footer
      %s15 = sadd.s32 1, %s11
    $region7: #{sinusoidal_position_embedding_forward.1} parent=1 // loop_footer_branch
      %10 = sbr.rel target = $region3
    $region8: #{sinusoidal_position_embedding_forward.1} parent=1 // loop_exit
      _
    %177 = vsyncpa [#allocation3], 1
    %s178 = scalar_lea.sflag [#allocation3], 1
    %179 = vsyncpa %s178, 1
    %180 = vsyncpa [#allocation4], 1
    %s181 = scalar_lea.sflag [#allocation4], 1
    %182 = vsyncpa %s181, 1

</llo_original>
